<compile_context>
chip_gen: v6e
topology: v6e:2x2x1
jax: 0.10.0
libtpu: 0.0.40
codegen_flags: <defaults>
</compile_context>

<pallas_src>
import jax
import jax.numpy as jnp
from jax.experimental import pallas as pl
from jax.experimental.pallas import tpu as pltpu


def _round_up(x: int, m: int) -> int:
    return ((x + m - 1) // m) * m


def _tile_vmem_bytes(tm, F, H, x_it, w_it, o_it):
    """Conservative VMEM footprint (bytes) of one pipelined row tile."""
    lane = 128
    F_l = _round_up(F, lane)
    H_l = _round_up(H, lane)
    x_tile = tm * F_l * x_it
    o_tile = tm * H_l * o_it
    m_tile = tm * lane * 4                       # (tm, 1) f32 mask, lane-padded
    w_buf = _round_up(F, 8) * H_l * w_it         # resident (constant index_map)
    b_buf = 8 * H_l * 4
    # assume double-buffering on everything (conservative)
    return 2 * (x_tile + o_tile + m_tile + w_buf + b_buf)


def _objwise_linear_kernel(flags_ref, x_ref, w_ref, b_ref, m_ref, o_ref):
    # flags_ref: (num_tiles,) int32 in SMEM (scalar prefetch), 1 = tile has any
    #            valid row, 0 = fully masked tile.
    # x_ref: (tm, F)   pipelined per grid step
    # w_ref: (F, H)    resident (constant index_map)
    # b_ref: (1, H)    resident
    # m_ref: (tm, 1)   pipelined per-tile row mask (f32 0/1)
    # o_ref: (tm, H)
    i = pl.program_id(0)
    live = flags_ref[i] > 0

    @pl.when(live)
    def _compute():
        y = jnp.dot(x_ref[...], w_ref[...], preferred_element_type=jnp.float32)
        y = y + b_ref[...].astype(jnp.float32)
        # masked_select -> op -> masked_scatter into zeros == select, with
        # exact zeros at invalid rows regardless of their contents.
        y = jnp.where(m_ref[...] != 0.0, y, 0.0)
        o_ref[...] = y.astype(o_ref.dtype)

    @pl.when(jnp.logical_not(live))
    def _zero():
        o_ref[...] = jnp.zeros_like(o_ref)


def objwise_linear(x, data_mask, w, b, *, tm=1024, vmem_budget_bytes=48 << 20):
    """x: (B, L, F), data_mask: (B, L) bool, w: (F, H), b: (H,) -> (B, L, H)."""
    B, L, F = x.shape
    Fw, H = w.shape
    assert Fw == F, (Fw, F)
    assert data_mask.shape == (B, L)
    assert b.shape == (H,)

    rows = B * L
    out_dtype = x.dtype
    x_it = jnp.dtype(x.dtype).itemsize
    w_it = jnp.dtype(w.dtype).itemsize
    o_it = jnp.dtype(out_dtype).itemsize

    # Sublane packing for the row-tile dim: 8 (f32) / 16 (bf16) / 32 (int8).
    sub = max(8, 32 // x_it)

    # Row tile: as large as the VMEM budget allows (per-step overhead ~0.35us).
    tm_eff = _round_up(max(sub, min(tm, rows)), sub)
    while tm_eff > sub and _tile_vmem_bytes(tm_eff, F, H, x_it, w_it, o_it) > vmem_budget_bytes:
        tm_eff = _round_up(max(sub, tm_eff // 2), sub)

    num_tiles = -(-rows // tm_eff)
    # Prefer >=2 tiles so ("parallel",) can use both TensorCores on v7x.
    if num_tiles < 2 and rows >= 2 * sub:
        tm_eff = _round_up(-(-rows // 2), sub)
        num_tiles = -(-rows // tm_eff)

    footprint = _tile_vmem_bytes(tm_eff, F, H, x_it, w_it, o_it)
    vmem_limit = int(min(max(footprint + (4 << 20), 16 << 20), 120 << 20))

    # Flat views only -- no pad / cast / slice of x or the output.
    x_flat = x.reshape(rows, F)
    m_flat = data_mask.reshape(rows, 1).astype(jnp.float32)   # tiny
    b_row = b.reshape(1, H)

    # Per-tile "any valid row" flags (0/1) for the scalar-prefetch skip.
    rows_pad = num_tiles * tm_eff
    mask_i32 = data_mask.reshape(rows).astype(jnp.int32)
    if rows_pad != rows:
        mask_i32 = jnp.pad(mask_i32, (0, rows_pad - rows))
    tile_flags = mask_i32.reshape(num_tiles, tm_eff).max(axis=1)

    grid_spec = pltpu.PrefetchScalarGridSpec(
        num_scalar_prefetch=1,
        grid=(num_tiles,),
        in_specs=[
            # flags[i] in {0, 1}: dead tiles are redirected to block 0 so no
            # fresh x / mask DMA is issued for them.
            pl.BlockSpec((tm_eff, F), lambda i, flags: (flags[i] * i, 0)),
            pl.BlockSpec((F, H), lambda i, flags: (0, 0)),        # resident W
            pl.BlockSpec((1, H), lambda i, flags: (0, 0)),        # resident b
            pl.BlockSpec((tm_eff, 1), lambda i, flags: (flags[i] * i, 0)),
        ],
        out_specs=pl.BlockSpec((tm_eff, H), lambda i, flags: (i, 0)),
    )

    out_flat = pl.pallas_call(
        _objwise_linear_kernel,
        out_shape=jax.ShapeDtypeStruct((rows, H), out_dtype),
        grid_spec=grid_spec,
        compiler_params=pltpu.CompilerParams(
            dimension_semantics=("parallel",),
            vmem_limit_bytes=vmem_limit,
        ),
    )(tile_flags, x_flat, w, b_row, m_flat)

    return out_flat.reshape(B, L, H)


def reference_objwise_linear(x, data_mask, w, b):
    """Pure-JAX reference matching the PyTorch Objwise(Linear) semantics."""
    y = jnp.einsum("blf,fh->blh", x, w) + b
    return jnp.where(data_mask[..., None], y, 0.0)


if __name__ == "__main__":
    key = jax.random.PRNGKey(0)
    k1, k2, k3, k4, k5, k6, k7 = jax.random.split(key, 7)

    # --- test 1: small shapes implied by the module forward ---
    B, L, F, H = 2, 8, 32, 32
    x = jax.random.normal(k1, (B, L, F), dtype=jnp.float32)
    data_mask = jax.random.bernoulli(k2, p=0.6, shape=(B, L))
    w = jax.random.normal(k3, (F, H), dtype=jnp.float32) / jnp.sqrt(F)
    bias = jax.random.normal(k4, (H,), dtype=jnp.float32) * 0.01

    out = jax.block_until_ready(objwise_linear(x, data_mask, w, bias))
    ref = reference_objwise_linear(x, data_mask, w, bias)
    assert out.shape == (B, L, H)
    assert jnp.allclose(out, ref, atol=1e-4, rtol=1e-4), float(jnp.max(jnp.abs(out - ref)))
    # rows where mask is False must be exactly zero (masked_scatter semantics)
    assert bool(jnp.all(jnp.where(data_mask[..., None], True, out == 0.0)))

    # --- test 2: ragged row count, multiple tiles, one fully-dead tile ---
    B2, L2, F2, H2 = 4, 200, 24, 48          # rows = 800, tm=256 -> 4 tiles
    x2 = jax.random.normal(k5, (B2, L2, F2), dtype=jnp.float32)
    m2 = jax.random.bernoulli(k6, p=0.5, shape=(B2, L2))
    m2 = m2.reshape(B2 * L2).at[256:512].set(False).reshape(B2, L2)  # dead tile 1
    w2 = jax.random.normal(k7, (F2, H2), dtype=jnp.float32) / jnp.sqrt(F2)
    b2 = jnp.zeros((H2,), dtype=jnp.float32)

    out2 = jax.block_until_ready(objwise_linear(x2, m2, w2, b2, tm=256))
    ref2 = reference_objwise_linear(x2, m2, w2, b2)
    assert out2.shape == (B2, L2, H2)
    assert jnp.allclose(out2, ref2, atol=1e-4, rtol=1e-4), float(jnp.max(jnp.abs(out2 - ref2)))
    assert bool(jnp.all(jnp.where(m2[..., None], True, out2 == 0.0)))

    print("KERNEL_OK")
</pallas_src>

<mosaic_0001>
module attributes {stable_mosaic.version = 11 : i64} {
  func.func @_objwise_linear_kernel(%arg0: i32, %arg1: memref<2xi32, #tpu.memory_space<smem>>, %arg2: memref<8x32xf32, #tpu.memory_space<vmem>>, %arg3: memref<32x32xf32, #tpu.memory_space<vmem>>, %arg4: memref<1x32xf32, #tpu.memory_space<vmem>>, %arg5: memref<8x1xf32, #tpu.memory_space<vmem>>, %arg6: memref<8x32xf32, #tpu.memory_space<vmem>>) attributes {dimension_semantics = [#tpu.dimension_semantics<parallel>], iteration_bounds = array<i64: 2>, scalar_prefetch = 1 : i64, scratch_operands = 0 : i64, tpu.core_type = #tpu.core_type<tc>, window_params = [{transform_indices = @transform_0, window_bounds = array<i64: 8, 32>}, {pipeline_mode = #tpu.pipeline_mode<synchronous>, transform_indices = @transform_1, window_bounds = array<i64: 32, 32>}, {pipeline_mode = #tpu.pipeline_mode<synchronous>, transform_indices = @transform_2, window_bounds = array<i64: 1, 32>}, {transform_indices = @transform_3, window_bounds = array<i64: 8, 1>}, {transform_indices = @transform_4, window_bounds = array<i64: 8, 32>}]} {
    %0 = arith.index_cast %arg0 : i32 to index
    %1 = memref.load %arg1[%0] : memref<2xi32, #tpu.memory_space<smem>>
    %c0_i32 = arith.constant 0 : i32
    %2 = arith.cmpi sgt, %1, %c0_i32 : i32
    %3 = arith.extui %2 : i1 to i32
    %c0_i32_0 = arith.constant 0 : i32
    %4 = arith.cmpi ne, %3, %c0_i32_0 : i32
    scf.if %4 {
      %c0 = arith.constant 0 : index
      %c0_2 = arith.constant 0 : index
      %8 = vector.load %arg2[%c0, %c0_2] : memref<8x32xf32, #tpu.memory_space<vmem>>, vector<8x32xf32>
      %c0_3 = arith.constant 0 : index
      %c0_4 = arith.constant 0 : index
      %9 = vector.load %arg3[%c0_3, %c0_4] : memref<32x32xf32, #tpu.memory_space<vmem>>, vector<32x32xf32>
      %cst = arith.constant dense<0.000000e+00> : vector<8x32xf32>
      %10 = tpu.matmul %8, %9, %cst {dimension_numbers = #tpu.dot_dimension_numbers<[1], [0], [0], [1], [0, 0, 1, 1], [], []>} : vector<8x32xf32>, vector<32x32xf32>, vector<8x32xf32> -> vector<8x32xf32>
      %c0_5 = arith.constant 0 : index
      %c0_6 = arith.constant 0 : index
      %11 = vector.load %arg4[%c0_5, %c0_6] : memref<1x32xf32, #tpu.memory_space<vmem>>, vector<1x32xf32>
      %12 = vector.broadcast %11 : vector<1x32xf32> to vector<8x32xf32>
      %13 = arith.addf %10, %12 : vector<8x32xf32>
      %c0_7 = arith.constant 0 : index
      %c0_8 = arith.constant 0 : index
      %14 = vector.load %arg5[%c0_7, %c0_8] : memref<8x1xf32, #tpu.memory_space<vmem>>, vector<8x1xf32>
      %cst_9 = arith.constant 0.000000e+00 : f32
      %15 = vector.broadcast %cst_9 : f32 to vector<8x1xf32>
      %16 = arith.cmpf one, %14, %15 : vector<8x1xf32>
      %cst_10 = arith.constant 0.000000e+00 : f32
      %17 = vector.shape_cast %16 : vector<8x1xi1> to vector<8x1xi1>
      %18 = vector.broadcast %17 : vector<8x1xi1> to vector<8x32xi1>
      %19 = vector.broadcast %cst_10 : f32 to vector<8x32xf32>
      %20 = arith.select %18, %13, %19 : vector<8x32xi1>, vector<8x32xf32>
      %c0_11 = arith.constant 0 : index
      %c0_12 = arith.constant 0 : index
      %21 = vector.load %arg6[%c0_11, %c0_12] : memref<8x32xf32, #tpu.memory_space<vmem>>, vector<8x32xf32>
      tpu.vector_store %arg6[%c0_11, %c0_12], %20 {strides = array<i32>} : memref<8x32xf32, #tpu.memory_space<vmem>>, vector<8x32xf32>,
    } else {
    }
    %true = arith.constant true
    %5 = arith.xori %2, %true : i1
    %6 = arith.extui %5 : i1 to i32
    %c0_i32_1 = arith.constant 0 : i32
    %7 = arith.cmpi ne, %6, %c0_i32_1 : i32
    scf.if %7 {
      %cst = arith.constant 0.000000e+00 : f32
      %8 = vector.broadcast %cst : f32 to vector<8x32xf32>
      %c0 = arith.constant 0 : index
      %c0_2 = arith.constant 0 : index
      %9 = vector.load %arg6[%c0, %c0_2] : memref<8x32xf32, #tpu.memory_space<vmem>>, vector<8x32xf32>
      tpu.vector_store %arg6[%c0, %c0_2], %8 {strides = array<i32>} : memref<8x32xf32, #tpu.memory_space<vmem>>, vector<8x32xf32>,
    } else {
    }
    return
  }
  func.func @transform_0(%arg0: i32, %arg1: memref<2xi32, #tpu.memory_space<smem>>) -> (i32, i32) {
    %0 = arith.index_cast %arg0 : i32 to index
    %1 = memref.load %arg1[%0] : memref<2xi32, #tpu.memory_space<smem>>
    %2 = arith.muli %1, %arg0 : i32
    %c0_i32 = arith.constant 0 : i32
    %c0_i32_0 = arith.constant 0 : i32
    return %2, %c0_i32 : i32, i32
  }
  func.func @transform_1(%arg0: i32, %arg1: memref<2xi32, #tpu.memory_space<smem>>) -> (i32, i32) {
    %c0_i32 = arith.constant 0 : i32
    %c0_i32_0 = arith.constant 0 : i32
    %c0_i32_1 = arith.constant 0 : i32
    return %c0_i32, %c0_i32_0 : i32, i32
  }
  func.func @transform_2(%arg0: i32, %arg1: memref<2xi32, #tpu.memory_space<smem>>) -> (i32, i32) {
    %c0_i32 = arith.constant 0 : i32
    %c0_i32_0 = arith.constant 0 : i32
    %c0_i32_1 = arith.constant 0 : i32
    return %c0_i32, %c0_i32_0 : i32, i32
  }
  func.func @transform_3(%arg0: i32, %arg1: memref<2xi32, #tpu.memory_space<smem>>) -> (i32, i32) {
    %0 = arith.index_cast %arg0 : i32 to index
    %1 = memref.load %arg1[%0] : memref<2xi32, #tpu.memory_space<smem>>
    %2 = arith.muli %1, %arg0 : i32
    %c0_i32 = arith.constant 0 : i32
    %c0_i32_0 = arith.constant 0 : i32
    return %2, %c0_i32 : i32, i32
  }
  func.func @transform_4(%arg0: i32, %arg1: memref<2xi32, #tpu.memory_space<smem>>) -> (i32, i32) {
    %c0_i32 = arith.constant 0 : i32
    %c0_i32_0 = arith.constant 0 : i32
    return %arg0, %c0_i32 : i32, i32
  }
}

</mosaic_0001>

<llo_original>
// kernel: tpu_custom_call.1
$region0: #{tpu_custom_call.1}
  #allocation0 [shape = 'u32[]', space=smem, size = 0x4, offset = 0x4, fixed_abs, tag = 'smem constant byte address 0x4 - core index']
  #allocation1 [shape = 'u32[144,128]{1,0:T(1,128)}', space=vmem, size = 0x12000, scoped, tag = 'internal scratch']
  #allocation2 [shape = 's32[1]{0}', space=sflag, size = 0x4, scoped, tag = 'scoped memory for tpu_custom_call.1']
  #allocation3 [shape = 'u8[512]{0}', space=smem, size = 0x200, scoped, tag = 'prefetched SMEM operand 0']
  %s0 = inlined_call_operand.vmem [shape: s32[2], index: 0, kind: input, shape index: {}]
  %s1 = inlined_call_operand.vmem [shape: f32[16,32], index: 1, kind: input, shape index: {}]
  %s2 = inlined_call_operand.hbm [shape: f32[32,32], index: 2, kind: input, shape index: {}]
  %s3 = inlined_call_operand.vmem [shape: f32[1,32], index: 3, kind: input, shape index: {}]
  %s4 = inlined_call_operand.vmem [shape: f32[16,1], index: 4, kind: input, shape index: {}]
  %s5 = inlined_call_operand.hbm [shape: f32[16,32], index: 5, kind: output, shape index: {}]
  %s6 = sld [smem:[#allocation0]]
  $region61: #{tpu_custom_call.1} parent=0
    _
  %s8 = ssub.s32 1, %s6
  %s9 = scalar_select 0, %s8, %s6
  %s10 = sshll.u32 %s0, 4
  %s11 = int_to_ptr.vmem [resolvable:$true] %s10
  %13 = dma.vmem_to_smem %s11, 16, [#allocation3], [#allocation2]
  %14 = dma.done [#allocation2], 16
  %15 = sfence
  $region1: #{tpu_custom_call.1} parent=0
    #allocation4 [shape = 'u8[16384]{0}', space=vmem, size = 0x4000, scoped, tag = 'input window, operand 2, single buffered']
    #allocation5 [shape = 's32[2]{0}', space=sflag, size = 0x8, scoped, tag = 'scoped memory for tpu_custom_call.1']
    #allocation6 [shape = 's32[2]{0}', space=sflag, size = 0x8, scoped, tag = 'scoped memory for tpu_custom_call.1']
    #allocation7 [shape = 'u8[8192]{0}', space=vmem, size = 0x2000, scoped, tag = 'output window, operand 0']
    %16 = vsyncpa [#allocation5], 0
    %17 = vsyncpa [#allocation6], 0
    %s18 = scalar_lea.sflag [#allocation6], 1
    %19 = vsyncpa %s18, 0
    loop: start=0, step=1, limit=4
    $region2: #{tpu_custom_call.1} parent=1 // loop_pre_header
      _
    $region3: #{tpu_custom_call.1} parent=1 // loop_header
      %s21 = sphi 0, %s25
      %p22 = scmp.ge.s32.totalorder %s21, 4
      %s35 = sphi 0, %s37
      %s38 = sphi 0, %s35
      %s39 = sphi 0, %s38
      %s55 = sphi 0, %s39
      %s59 = sphi 0, %s59
      %s61 = sphi 0, %s59
      %s62 = sphi 0, %s61
      %s76 = sphi 0, %s62
      %s80 = sphi 0, %s80
      %s82 = sphi 0, %s80
      %s83 = sphi 0, %s82
      %s97 = sphi 0, %s83
      %s107 = sphi 0, %s109
      %s110 = sphi 0, %s107
      %s111 = sphi 0, %s110
      %s127 = sphi 0, %s111
      %s133 = sphi 0, %s135
      %s136 = sphi 0, %s133
      %s137 = sphi 0, %s136
      %s153 = sphi 0, %s137
    $region4: #{tpu_custom_call.1} parent=1 // loop_header_branch
      %24 = sbr.rel (%p22) target = $region8
    $region5: #{tpu_custom_call.1} parent=1 // loop_body
      %s26 = ssub.s32 %s21, 1
      %s27 = ssub.s32 %s21, 2
      %s28 = sadd.s32 %s21, 1
      %s29 = sld [smem:[#allocation3 + %s21]]
      %s30 = smul.u32 %s29, %s21
      %s31 = sld [smem:[#allocation3 + %s28]]
      %s32 = smul.u32 %s31, %s28
      %s33 = ssub.s32 %s30, %s32
      %p34 = scmp.eq.s32.totalorder %s33, 0
      %s36 = sadd.s32 %s35, 1
      %s37 = scalar_select %p34, %s35, %s36
      %p40 = pneg %p34
      %p41 = scmp.eq.s32.totalorder %s21, 1
      %p42 = por %p40, %p41
      %p43 = scmp.ne.s32.totalorder %s35, %s38
      %p44 = scmp.eq.s32.totalorder %s21, 0
      %p45 = por %p43, %p44
      %p46 = scmp.ne.s32.totalorder %s35, %s38
      %p47 = scmp.eq.s32.totalorder %s26, 1
      %p48 = por %p46, %p47
      %p49 = scmp.ne.s32.totalorder %s38, %s39
      %p50 = scmp.eq.s32.totalorder %s26, 0
      %p51 = por %p49, %p50
      %p52 = scmp.ne.s32.totalorder %s38, %s39
      %p53 = scmp.eq.s32.totalorder %s27, 1
      %p54 = por %p52, %p53
      %p56 = scmp.ne.s32.totalorder %s39, %s55
      %p57 = scmp.eq.s32.totalorder %s27, 0
      %p58 = por %p56, %p57
      %s60 = sadd.s32 %s59, 1
      %p63 = scmp.eq.s32.totalorder %s21, 1
      %p64 = scmp.ne.s32.totalorder %s59, %s61
      %p65 = scmp.eq.s32.totalorder %s21, 0
      %p66 = por %p64, %p65
      %p67 = scmp.ne.s32.totalorder %s59, %s61
      %p68 = scmp.eq.s32.totalorder %s26, 1
      %p69 = por %p67, %p68
      %p70 = scmp.ne.s32.totalorder %s61, %s62
      %p71 = scmp.eq.s32.totalorder %s26, 0
      %p72 = por %p70, %p71
      %p73 = scmp.ne.s32.totalorder %s61, %s62
      %p74 = scmp.eq.s32.totalorder %s27, 1
      %p75 = por %p73, %p74
      %p77 = scmp.ne.s32.totalorder %s62, %s76
      %p78 = scmp.eq.s32.totalorder %s27, 0
      %p79 = por %p77, %p78
      %s81 = sadd.s32 %s80, 1
      %p84 = scmp.eq.s32.totalorder %s21, 1
      %p85 = scmp.ne.s32.totalorder %s80, %s82
      %p86 = scmp.eq.s32.totalorder %s21, 0
      %p87 = por %p85, %p86
      %p88 = scmp.ne.s32.totalorder %s80, %s82
      %p89 = scmp.eq.s32.totalorder %s26, 1
      %p90 = por %p88, %p89
      %p91 = scmp.ne.s32.totalorder %s82, %s83
      %p92 = scmp.eq.s32.totalorder %s26, 0
      %p93 = por %p91, %p92
      %p94 = scmp.ne.s32.totalorder %s82, %s83
      %p95 = scmp.eq.s32.totalorder %s27, 1
      %p96 = por %p94, %p95
      %p98 = scmp.ne.s32.totalorder %s83, %s97
      %p99 = scmp.eq.s32.totalorder %s27, 0
      %p100 = por %p98, %p99
      %s101 = sld [smem:[#allocation3 + %s21]]
      %s102 = smul.u32 %s101, %s21
      %s103 = sld [smem:[#allocation3 + %s28]]
      %s104 = smul.u32 %s103, %s28
      %s105 = ssub.s32 %s102, %s104
      %p106 = scmp.eq.s32.totalorder %s105, 0
      %s108 = sadd.s32 %s107, 1
      %s109 = scalar_select %p106, %s107, %s108
      %p112 = pneg %p106
      %p113 = scmp.eq.s32.totalorder %s21, 1
      %p114 = por %p112, %p113
      %p115 = scmp.ne.s32.totalorder %s107, %s110
      %p116 = scmp.eq.s32.totalorder %s21, 0
      %p117 = por %p115, %p116
      %p118 = scmp.ne.s32.totalorder %s107, %s110
      %p119 = scmp.eq.s32.totalorder %s26, 1
      %p120 = por %p118, %p119
      %p121 = scmp.ne.s32.totalorder %s110, %s111
      %p122 = scmp.eq.s32.totalorder %s26, 0
      %p123 = por %p121, %p122
      %p124 = scmp.ne.s32.totalorder %s110, %s111
      %p125 = scmp.eq.s32.totalorder %s27, 1
      %p126 = por %p124, %p125
      %p128 = scmp.ne.s32.totalorder %s111, %s127
      %p129 = scmp.eq.s32.totalorder %s27, 0
      %p130 = por %p128, %p129
      %s131 = ssub.s32 %s21, %s28
      %p132 = scmp.eq.s32.totalorder %s131, 0
      %s134 = sadd.s32 %s133, 1
      %s135 = scalar_select %p132, %s133, %s134
      %p138 = pneg %p132
      %p139 = scmp.eq.s32.totalorder %s21, 1
      %p140 = por %p138, %p139
      %p141 = scmp.ne.s32.totalorder %s133, %s136
      %p142 = scmp.eq.s32.totalorder %s21, 0
      %p143 = por %p141, %p142
      %p144 = scmp.ne.s32.totalorder %s133, %s136
      %p145 = scmp.eq.s32.totalorder %s26, 1
      %p146 = por %p144, %p145
      %p147 = scmp.ne.s32.totalorder %s136, %s137
      %p148 = scmp.eq.s32.totalorder %s26, 0
      %p149 = por %p147, %p148
      %p150 = scmp.ne.s32.totalorder %s136, %s137
      %p151 = scmp.eq.s32.totalorder %s27, 1
      %p152 = por %p150, %p151
      %p154 = scmp.ne.s32.totalorder %s137, %s153
      %p155 = scmp.eq.s32.totalorder %s27, 0
      %p156 = por %p154, %p155
      %p157 = scmp.le.s32.totalorder 1, %s21
      %p158 = scmp.lt.s32.totalorder %s21, 3
      %p159 = pnand %p157, %p158
      %p160 = pneg %p159
      // Predicated region
      $region9: #{tpu_custom_call.1} parent=5 // pred_check
        _
      $region10: #{tpu_custom_call.1} parent=5 // pred_check_branch
        %162 = sbr.rel (%p159) target = $region12
      $region11: #{tpu_custom_call.1} parent=5 // pred_region
        %s163 = ssub.s32 %s21, 1
        // Predicated region
        $region13: #{tpu_custom_call.1} parent=11 // pred_check
          %p164 = pneg %p72
        $region14: #{tpu_custom_call.1} parent=11 // pred_check_branch
          %166 = sbr.rel (%p164) target = $region16
        $region15: #{tpu_custom_call.1} parent=11 // pred_region
          %s168 = ssub.s32 512, 512
          %169 = vsyncadd [#allocation5], %s168
          %s170 = sshll.u32 [#allocation4], 4
          %s171 = int_to_ptr.vmem [resolvable:$true] %s170
          %176 = dma.hbm_to_vmem [thread:$0]  %s2, 512, %s171, [#allocation5], 128, 128, 8
        $region16: #{tpu_custom_call.1} parent=11 // pred_fallthru
          _
        // Predicated region
        $region17: #{tpu_custom_call.1} parent=11 // pred_check
          %p177 = pneg %p93
        $region18: #{tpu_custom_call.1} parent=11 // pred_check_branch
          %179 = sbr.rel (%p177) target = $region20
        $region19: #{tpu_custom_call.1} parent=11 // pred_region
          _
        $region20: #{tpu_custom_call.1} parent=11 // pred_fallthru
          _
      $region12: #{tpu_custom_call.1} parent=5 // pred_fallthru
        _
      %p180 = scmp.lt.s32.totalorder %s21, 2
      // Predicated region
      $region21: #{tpu_custom_call.1} parent=5 // pred_check
        %p181 = pneg %p180
      $region22: #{tpu_custom_call.1} parent=5 // pred_check_branch
        %183 = sbr.rel (%p181) target = $region24
      $region23: #{tpu_custom_call.1} parent=5 // pred_region
        // Predicated region
        $region25: #{tpu_custom_call.1} parent=23 // pred_check
          %p184 = pneg %p45
        $region26: #{tpu_custom_call.1} parent=23 // pred_check_branch
          %186 = sbr.rel (%p184) target = $region28
        $region27: #{tpu_custom_call.1} parent=23 // pred_region
          %s187 = sld [smem:[#allocation3 + %s21]]
          %s188 = smul.u32 %s187, %s21
          %p189 = scmp.lt.s32.totalorder %s188, 1
          %s190 = scalar_select %p189, %s188, 1
          %s191 = smul.addr %s190, 8
          %s192 = scalar_lea.vmem %s1, %s191
          %s193 = sld [smem:[#allocation3 + %s21]]
          %s194 = smul.u32 %s193, %s21
        $region28: #{tpu_custom_call.1} parent=23 // pred_fallthru
          _
        // Predicated region
        $region29: #{tpu_custom_call.1} parent=23 // pred_check
          %p195 = pneg %p117
        $region30: #{tpu_custom_call.1} parent=23 // pred_check_branch
          %197 = sbr.rel (%p195) target = $region32
        $region31: #{tpu_custom_call.1} parent=23 // pred_region
          %s198 = sld [smem:[#allocation3 + %s21]]
          %s199 = smul.u32 %s198, %s21
          %p200 = scmp.lt.s32.totalorder %s199, 1
          %s201 = scalar_select %p200, %s199, 1
          %s202 = smul.addr %s201, 8
          %s203 = scalar_lea.vmem %s4, %s202
          %s204 = sld [smem:[#allocation3 + %s21]]
          %s205 = smul.u32 %s204, %s21
        $region32: #{tpu_custom_call.1} parent=23 // pred_fallthru
          _
      $region24: #{tpu_custom_call.1} parent=5 // pred_fallthru
        _
      %p206 = scmp.le.s32.totalorder 1, %s21
      %p207 = scmp.lt.s32.totalorder %s21, 3
      %p208 = pnand %p206, %p207
      %p209 = pneg %p208
      // Predicated region
      $region33: #{tpu_custom_call.1} parent=5 // pred_check
        _
      $region34: #{tpu_custom_call.1} parent=5 // pred_check_branch
        %211 = sbr.rel (%p208) target = $region36
      $region35: #{tpu_custom_call.1} parent=5 // pred_region
        %s212 = ssub.s32 %s21, 1
        // Predicated region
        $region37: #{tpu_custom_call.1} parent=35 // pred_check
          %p213 = pneg %p72
        $region38: #{tpu_custom_call.1} parent=35 // pred_check_branch
          %215 = sbr.rel (%p213) target = $region40
        $region39: #{tpu_custom_call.1} parent=35 // pred_region
          %216 = dma.done [#allocation5], 512
        $region40: #{tpu_custom_call.1} parent=35 // pred_fallthru
          _
        %s217 = sld [smem:[#allocation3 + %s26]]
        %s218 = smul.u32 %s217, %s26
        %p219 = scmp.lt.s32.totalorder %s218, 1
        %s220 = scalar_select %p219, %s218, 1
        %s221 = smul.addr %s220, 8
        %s222 = scalar_lea.vmem %s1, %s221
        %p223 = pneg %p51
        %p224 = pneg %p48
        %p225 = pneg %p72
        %p226 = pneg %p69
        %p227 = pneg %p93
        %p228 = pneg %p90
        %s229 = sld [smem:[#allocation3 + %s26]]
        %s230 = smul.u32 %s229, %s26
        %p231 = scmp.lt.s32.totalorder %s230, 1
        %s232 = scalar_select %p231, %s230, 1
        %s233 = smul.addr %s232, 8
        %s234 = scalar_lea.vmem %s4, %s233
        %p235 = pneg %p123
        %p236 = pneg %p120
        %p237 = pneg %p149
        %p238 = pneg %p146
        %s239 = sand.u32 %s136, 1
        %s240 = scalar_lea.sflag [#allocation6], %s239
        %s241 = sand.u32 %s136, 1
        %s242 = smul.addr %s241, 8
        %s243 = scalar_lea.vmem [#allocation7], %s242
        %s244 = sld [smem:[#allocation3 + %s26]]
        %s245 = smul.u32 %s244, %s26
        %p246 = scmp.lt.s32.totalorder %s245, 1
        %s247 = scalar_select %p246, %s245, 1
        %s248 = smul.addr %s247, 8
        %s249 = scalar_lea.vmem %s1, %s248
        %s250 = sld [smem:[#allocation3 + %s26]]
        %s251 = smul.u32 %s250, %s26
        %s252 = sld [smem:[#allocation3 + %s26]]
        %s253 = smul.u32 %s252, %s26
        %p254 = scmp.lt.s32.totalorder %s253, 1
        %s255 = scalar_select %p254, %s253, 1
        %s256 = smul.addr %s255, 8
        %s257 = scalar_lea.vmem %s4, %s256
        %s258 = sld [smem:[#allocation3 + %s26]]
        %s259 = smul.u32 %s258, %s26
        %s260 = sld [smem:[#allocation3 + %s26]]
        %p261 = scmp.gt.s32.totalorder %s260, 0
        // Predicated region
        $region41: #{tpu_custom_call.1} parent=35 // pred_check
          %p262 = pneg %p261
        $region42: #{tpu_custom_call.1} parent=35 // pred_check_branch
          %264 = sbr.rel (%p262) target = $region44
        $region43: #{tpu_custom_call.1} parent=35 // pred_region
          %v265 = vld [vmem:[%s249] sm:$0xff]
          %v266 = vld [vmem:[#allocation4] sm:$0xff]
          %v267 = vld [vmem:[#allocation4 + $0x8] sm:$0xff]
          %v268 = vld [vmem:[#allocation4 + $0x10] sm:$0xff]
          %v269 = vld [vmem:[#allocation4 + $0x18] sm:$0xff]
          %v270 = vld [vmem:[%s3] sm:$0x1]
          %v272 = vlaneseq
          %v273 = vshrl.u32 %v272, 7
          %v274 = vsub.s32 0, %v273
          %v275 = vrot.slane %v270, %v274
          %vm277 = vcmask 261120
          %v279 = vsel %vm277, %v265, 0
          %281 = vmatprep.subr.mxu0 0.0
          %282 = vmatpush1.msra.mxu0 0.0
          %283 = vmatprep.subr.mxu0 0.0
          %284 = vmatpush1.msra.mxu0 0.0
          %285 = vmatprep.subr.mxu0 0.0
          %286 = vmatpush1.msra.mxu0 0.0
          %287 = vmatprep.subr.mxu0 0.0
          %288 = vmatpush1.msra.mxu0 0.0
          %289 = vmatprep.subr.mxu0 0.0
          %290 = vmatpush1.msra.mxu0 0.0
          %291 = vmatprep.subr.mxu0 0.0
          %292 = vmatpush1.msra.mxu0 0.0
          %293 = vmatprep.subr.mxu0 0.0
          %294 = vmatpush1.msra.mxu0 0.0
          %295 = vmatprep.subr.mxu0 0.0
          %296 = vmatpush1.msra.mxu0 0.0
          %297 = vmatprep.subr.mxu0 0.0
          %298 = vmatpush1.msra.mxu0 0.0
          %299 = vmatprep.subr.mxu0 0.0
          %300 = vmatpush1.msra.mxu0 0.0
          %301 = vmatprep.subr.mxu0 0.0
          %302 = vmatpush1.msra.mxu0 0.0
          %303 = vmatprep.subr.mxu0 0.0
          %304 = vmatpush1.msra.mxu0 0.0
          %305 = vmatprep.subr.mxu0 0.0
          %306 = vmatpush1.msra.mxu0 %v269
          %307 = vmatprep.subr.mxu0 0.0
          %308 = vmatpush1.msra.mxu0 %v268
          %309 = vmatprep.subr.mxu0 0.0
          %310 = vmatpush1.msra.mxu0 %v267
          %311 = vmatprep.subr.mxu0 0.0
          %312 = vmatpush1.msra.mxu0 %v266
          %313 = vmatprep.subr.mxu0 0.0
          %314 = vmatpush2.msra.mxu0 0.0
          %315 = vmatprep.subr.mxu0 0.0
          %316 = vmatpush2.msra.mxu0 0.0
          %317 = vmatprep.subr.mxu0 0.0
          %318 = vmatpush2.msra.mxu0 0.0
          %319 = vmatprep.subr.mxu0 0.0
          %320 = vmatpush2.msra.mxu0 0.0
          %321 = vmatprep.subr.mxu0 0.0
          %322 = vmatpush2.msra.mxu0 0.0
          %323 = vmatprep.subr.mxu0 0.0
          %324 = vmatpush2.msra.mxu0 0.0
          %325 = vmatprep.subr.mxu0 0.0
          %326 = vmatpush2.msra.mxu0 0.0
          %327 = vmatprep.subr.mxu0 0.0
          %328 = vmatpush2.msra.mxu0 0.0
          %329 = vmatprep.subr.mxu0 0.0
          %330 = vmatpush2.msra.mxu0 0.0
          %331 = vmatprep.subr.mxu0 0.0
          %332 = vmatpush2.msra.mxu0 0.0
          %333 = vmatprep.subr.mxu0 0.0
          %334 = vmatpush2.msra.mxu0 0.0
          %335 = vmatprep.subr.mxu0 0.0
          %336 = vmatpush2.msra.mxu0 0.0
          %337 = vmatprep.subr.mxu0 0.0
          %338 = vmatpush2.msra.mxu0 0.0
          %339 = vmatprep.subr.mxu0 0.0
          %340 = vmatpush2.msra.mxu0 0.0
          %341 = vmatprep.subr.mxu0 0.0
          %342 = vmatpush2.msra.mxu0 0.0
          %343 = vmatprep.subr.mxu0 0.0
          %344 = vmatpush2.msra.mxu0 0.0
          %345 = vmatprep.mubr.f32.mxu0 0.0
          %346 = vmatmul.mubr.f32.gmra.mxu0 %v279
          %v347 = vpop.f32.mrf.mxu0
          %v348 = vadd.f32 %v275, %v347
          %v349 = vpop.f32.mrf.mxu0
          %350 = vdwg.mxu0
          %v351 = vld [vmem:[%s257] sm:$0xff]
          %vm352 = vcmp.ne.f32.partialorder %v351, 0.0
          %v353 = vsel %vm352, 1, 0
          %354 = vset.pattern.permute.xlu0 0
          %355 = vperm.xlu0 %354, %v353
          %v356 = vpop.permute.xlu0 %355
          %vm357 = vcmp.eq.s32.totalorder %v356, 1
          %v358 = vsel %vm357, %v348, 0.0
          %359 = vst.msk [vmem:[%s243] sm:$0xff] %vm277, %v358
        $region44: #{tpu_custom_call.1} parent=35 // pred_fallthru
          _
        %p360 = scmp.le.s32.totalorder %s260, 0
        // Predicated region
        $region45: #{tpu_custom_call.1} parent=35 // pred_check
          %p361 = pneg %p360
        $region46: #{tpu_custom_call.1} parent=35 // pred_check_branch
          %363 = sbr.rel (%p361) target = $region48
        $region47: #{tpu_custom_call.1} parent=35 // pred_region
          %vm364 = vcmask 261120
          %365 = vst.msk [vmem:[%s243] sm:$0xff] %vm364, 0.0
        $region48: #{tpu_custom_call.1} parent=35 // pred_fallthru
          _
        %s366 = sand.u32 %s136, 1
        %s367 = scalar_lea.sflag [#allocation6], %s366
        %s368 = sand.u32 %s136, 1
        %s369 = smul.addr %s368, 8
        %s370 = scalar_lea.vmem [#allocation7], %s369
        // Predicated region
        $region49: #{tpu_custom_call.1} parent=35 // pred_check
          %p371 = pneg %p146
        $region50: #{tpu_custom_call.1} parent=35 // pred_check_branch
          %373 = sbr.rel (%p371) target = $region52
        $region51: #{tpu_custom_call.1} parent=35 // pred_region
          %s375 = ssub.s32 128, 128
          %376 = vsyncadd %s367, %s375
          %s377 = smul.addr %s26, 128
          %s378 = scalar_lea.hbm %s5, %s377
          %s380 = sshll.u32 %s370, 4
          %s381 = int_to_ptr.vmem [resolvable:$true] %s380
          %383 = dma.vmem_to_hbm [thread:$0]  %s381, 128, %s378, %s367
        $region52: #{tpu_custom_call.1} parent=35 // pred_fallthru
          _
      $region36: #{tpu_custom_call.1} parent=5 // pred_fallthru
        _
      %p384 = scmp.le.s32.totalorder 2, %s21
      // Predicated region
      $region53: #{tpu_custom_call.1} parent=5 // pred_check
        %p385 = pneg %p384
      $region54: #{tpu_custom_call.1} parent=5 // pred_check_branch
        %387 = sbr.rel (%p385) target = $region56
      $region55: #{tpu_custom_call.1} parent=5 // pred_region
        %s388 = ssub.s32 %s21, 2
        // Predicated region
        $region57: #{tpu_custom_call.1} parent=55 // pred_check
          %p389 = pneg %p152
        $region58: #{tpu_custom_call.1} parent=55 // pred_check_branch
          %391 = sbr.rel (%p389) target = $region60
        $region59: #{tpu_custom_call.1} parent=55 // pred_region
          %s392 = sand.u32 %s137, 1
          %s393 = scalar_lea.sflag [#allocation6], %s392
          %s394 = sand.u32 %s137, 1
          %s395 = smul.addr %s394, 8
          %s396 = scalar_lea.vmem [#allocation7], %s395
          %397 = dma.done %s393, 128
        $region60: #{tpu_custom_call.1} parent=55 // pred_fallthru
          _
      $region56: #{tpu_custom_call.1} parent=5 // pred_fallthru
        _
    $region6: #{tpu_custom_call.1} parent=1 // loop_footer
      %s25 = sadd.s32 1, %s21
    $region7: #{tpu_custom_call.1} parent=1 // loop_footer_branch
      %20 = sbr.rel target = $region3
    $region8: #{tpu_custom_call.1} parent=1 // loop_exit
      _
    %398 = vsyncpa [#allocation5], 1
    %s399 = scalar_lea.sflag [#allocation5], 1
    %400 = vsyncpa %s399, 1
    %401 = vsyncpa [#allocation6], 1
    %s402 = scalar_lea.sflag [#allocation6], 1
    %403 = vsyncpa %s402, 1

</llo_original>
